<compile_context>
chip_gen: v7x
topology: tpu7x:2x2x1
jax: 0.10.0
libtpu: 0.0.40
codegen_flags: <defaults>
</compile_context>

<pallas_src>
import numpy as np
import jax
import jax.numpy as jnp
from jax.experimental import pallas as pl
from jax.experimental.pallas import tpu as pltpu

N_QUBITS = 4
FEATURES_PER_QUBIT = 4
TOTAL_FEATURES = N_QUBITS * FEATURES_PER_QUBIT   # 16
DIM = 2 ** N_QUBITS                              # 16
MAX_BATCH_TILE = 2048                            # lanes per grid step (mult. of 128)

N_KEPT = 10          # basis states with nonzero sum-Z weight (popcount != 2)
N_POS = 5            # of which 5 have positive weight
HALF_ROWS = 12       # kept rows padded to a sublane-friendly 12
W_ROWS = 2 * HALF_ROWS   # 24  (Re block + Im block)
W_COLS = 2 * DIM         # 32  (psi_re ; psi_im)


# ----------------------------------------------------------------------------
# Host-side glue: fixed part of the circuit folded into one real matrix.
# ----------------------------------------------------------------------------
def _rot_matrix(phi, theta, omega):
    """PennyLane qml.Rot(phi, theta, omega) = RZ(omega) RY(theta) RZ(phi)."""
    c, s = np.cos(theta / 2.0), np.sin(theta / 2.0)
    return np.array(
        [[np.exp(-1j * (phi + omega) / 2.0) * c, -np.exp(1j * (phi - omega) / 2.0) * s],
         [np.exp(-1j * (phi - omega) / 2.0) * s, np.exp(1j * (phi + omega) / 2.0) * c]],
        dtype=np.complex128)


def _cnot_matrix(control, target, n=N_QUBITS):
    """CNOT on wires [control, target]; wire 0 is the most-significant bit."""
    dim = 2 ** n
    m = np.zeros((dim, dim), dtype=np.complex128)
    for idx in range(dim):
        if (idx >> (n - 1 - control)) & 1:
            j = idx ^ (1 << (n - 1 - target))
        else:
            j = idx
        m[j, idx] = 1.0
    return m


def _build_fixed_unitary(weights):
    """V = U_rot @ U_entangle  (entangler applied first, then Rot layer)."""
    u_ent = np.eye(DIM, dtype=np.complex128)
    for i in range(N_QUBITS - 1):
        u_ent = _cnot_matrix(i, i + 1) @ u_ent
    u_rot = _rot_matrix(*weights[0])
    for q in range(1, N_QUBITS):
        u_rot = np.kron(u_rot, _rot_matrix(*weights[q]))
    return u_rot @ u_ent


def _build_z_sum_diag():
    """Diagonal of sum_q PauliZ_q in the computational basis."""
    d = np.zeros((DIM,), dtype=np.float64)
    for idx in range(DIM):
        d[idx] = sum(1.0 - 2.0 * ((idx >> (N_QUBITS - 1 - q)) & 1)
                     for q in range(N_QUBITS))
    return d


def _build_folded_w(weights):
    """Fold sqrt(|diag(sum Z)|) into V, drop zero-weight rows, pad to 24x32.

    Rows 0..9  = sqrt|d| * [Re V_kept, -Im V_kept]   (5 positive-d, 5 negative-d)
    Rows 12..21= sqrt|d| * [Im V_kept,  Re V_kept]
    Rows 10,11,22,23 are zero padding (contribute 0 after squaring).
    """
    v = _build_fixed_unitary(weights)
    d = _build_z_sum_diag()
    pos = [i for i in range(DIM) if d[i] > 0]    # [0, 1, 2, 4, 8]
    neg = [i for i in range(DIM) if d[i] < 0]    # [7, 11, 13, 14, 15]
    kept = pos + neg
    scale = np.sqrt(np.abs(d[kept]))[:, None]
    vk = scale * v[kept, :]
    top = np.hstack([vk.real, -vk.imag])
    bot = np.hstack([vk.imag, vk.real])
    w = np.zeros((W_ROWS, W_COLS), dtype=np.float32)
    w[0:N_KEPT, :] = top
    w[HALF_ROWS:HALF_ROWS + N_KEPT, :] = bot
    return w


# ----------------------------------------------------------------------------
# Pallas kernel: lane-dense (batch-on-lanes) state prep + fused matmul epilogue.
# ----------------------------------------------------------------------------
def _qcircuit_kernel(x_ref, w_ref, o_ref):
    # x_ref: (4, TB)  f32 -- per-qubit angles, batch on lanes
    # w_ref: (24, 32) f32 -- fixed unitary with Z-diagonal folded in
    # o_ref: (1, TB)  f32

    # Feature map, vectorized across qubits: |psi_q> = RX RZ RY RX |0>.
    th = x_ref[...] * 0.5                         # (4, TB)
    c = jnp.cos(th)
    s = jnp.sin(th)
    c2 = c * c
    s2 = s * s
    cs = c * s
    # after RX, RY, RZ (shared trig products reused):
    u0r = c * c2 + s * s2
    u0i = c * s2 - s * c2
    u1r = cs * (c + s)
    u1i = cs * (s - c)
    # final RX -> single-qubit amplitudes a0, a1 (row q = qubit q):
    a0r = c * u0r + s * u1i
    a0i = c * u0i - s * u1r
    a1r = c * u1r + s * u0i
    a1i = c * u1i - s * u0r

    def kron2(ql, qr):
        """(4, TB) complex amplitudes of |psi_ql> (x) |psi_qr>, index = 2*bl+br."""
        lr = jnp.concatenate([a0r[ql:ql + 1], a0r[ql:ql + 1],
                              a1r[ql:ql + 1], a1r[ql:ql + 1]], axis=0)
        li = jnp.concatenate([a0i[ql:ql + 1], a0i[ql:ql + 1],
                              a1i[ql:ql + 1], a1i[ql:ql + 1]], axis=0)
        rr = jnp.concatenate([a0r[qr:qr + 1], a1r[qr:qr + 1],
                              a0r[qr:qr + 1], a1r[qr:qr + 1]], axis=0)
        ri = jnp.concatenate([a0i[qr:qr + 1], a1i[qr:qr + 1],
                              a0i[qr:qr + 1], a1i[qr:qr + 1]], axis=0)
        return lr * rr - li * ri, lr * ri + li * rr

    hi_re, hi_im = kron2(0, 1)                    # bits (q0, q1)
    lo_re, lo_im = kron2(2, 3)                    # bits (q2, q3)

    # Outer product hi (x) lo in sublane-dense (4, TB) chunks; idx = 4*h + l.
    re_chunks, im_chunks = [], []
    for h in range(4):
        hr = hi_re[h:h + 1, :]
        hj = hi_im[h:h + 1, :]
        re_chunks.append(hr * lo_re - hj * lo_im)
        im_chunks.append(hr * lo_im + hj * lo_re)

    # psi = [Re(psi); Im(psi)]  -> (32, TB), assembled from eight (4, TB) slabs.
    psi = jnp.concatenate(re_chunks + im_chunks, axis=0)

    # Fixed unitary + Z-diagonal in ONE fused real matmul on the MXU (kept f32:
    # bf16 would blow the 1e-4 tolerance; MXU is nowhere near the bottleneck).
    out = jnp.dot(w_ref[...], psi, preferred_element_type=jnp.float32)   # (24, TB)

    # Signed sum of squares: rows [0,5)+[12,17) carry +1, the rest -1
    # (zero-padded rows contribute nothing).
    ridx = jax.lax.broadcasted_iota(jnp.int32, (W_ROWS, 1), 0)
    pos_mask = (ridx < N_POS) | ((ridx >= HALF_ROWS) & (ridx < HALF_ROWS + N_POS))
    sign = jnp.where(pos_mask, jnp.float32(1.0), jnp.float32(-1.0))
    o_ref[...] = jnp.sum(out * out * sign, axis=0, keepdims=True)


def _round_up(a, b):
    return ((a + b - 1) // b) * b


def _choose_tile(batch):
    """Lane tile: as large as possible, but >= 2 grid steps when batch allows
    (v7x has 2 TensorCores to shard the 'parallel' axis across)."""
    b128 = _round_up(batch, 128)
    tile = min(MAX_BATCH_TILE, b128)
    if b128 >= 2 * 128 and b128 <= tile:
        tile = _round_up((b128 + 1) // 2, 128)
    return tile


def quantum_forward(x, weights_np):
    """Forward pass: x (batch, 16) float32 -> (batch,) float32."""
    x = jnp.asarray(x, jnp.float32)
    batch = x.shape[0]
    tile = _choose_tile(batch)
    padded = _round_up(batch, tile)

    # Only features 0, 4, 8, 12 are ever read by the circuit (PennyLane quirk);
    # ship just those 4 rows, batch on lanes, zero-padded to a tile multiple.
    x4 = x[:, ::FEATURES_PER_QUBIT].T                       # (4, batch)
    x4 = jnp.pad(x4, ((0, 0), (0, padded - batch)))         # (4, padded)

    w = jnp.asarray(_build_folded_w(weights_np))            # (24, 32)

    grid = (padded // tile,)
    out = pl.pallas_call(
        _qcircuit_kernel,
        out_shape=jax.ShapeDtypeStruct((1, padded), jnp.float32),
        grid_spec=pltpu.PrefetchScalarGridSpec(
            num_scalar_prefetch=0,
            grid=grid,
            in_specs=[
                pl.BlockSpec((N_QUBITS, tile), lambda i: (0, i)),
                # constant index_map: W fetched once, VMEM-resident across steps
                pl.BlockSpec((W_ROWS, W_COLS), lambda i: (0, 0)),
            ],
            out_specs=pl.BlockSpec((1, tile), lambda i: (0, i)),
        ),
        compiler_params=pltpu.CompilerParams(
            dimension_semantics=("parallel",)),
    )(x4, w)
    return out[0, :batch]


# ----------------------------------------------------------------------------
# Independent numpy reference (gate-by-gate statevector simulation).
# ----------------------------------------------------------------------------
def _ref_forward(x_np, weights_np):
    def rx(t):
        c, s = np.cos(t / 2), np.sin(t / 2)
        return np.array([[c, -1j * s], [-1j * s, c]], dtype=np.complex128)

    def ry(t):
        c, s = np.cos(t / 2), np.sin(t / 2)
        return np.array([[c, -s], [s, c]], dtype=np.complex128)

    def rz(t):
        return np.diag([np.exp(-1j * t / 2), np.exp(1j * t / 2)]).astype(np.complex128)

    def full_1q(u, wire):
        ops = [np.eye(2, dtype=np.complex128)] * N_QUBITS
        ops[wire] = u
        m = ops[0]
        for o in ops[1:]:
            m = np.kron(m, o)
        return m

    cnots = [_cnot_matrix(i, i + 1) for i in range(N_QUBITS - 1)]
    rot_fulls = [full_1q(_rot_matrix(*weights_np[q]), q) for q in range(N_QUBITS)]
    diag = _build_z_sum_diag()

    outs = np.zeros((x_np.shape[0],), dtype=np.float64)
    for b in range(x_np.shape[0]):
        state = np.zeros((DIM,), dtype=np.complex128)
        state[0] = 1.0
        for q in range(N_QUBITS):
            t = float(x_np[b, FEATURES_PER_QUBIT * q])
            for g in (rx, ry, rz, rx):
                state = full_1q(g(t), q) @ state
        for m in cnots:
            state = m @ state
        for m in rot_fulls:
            state = m @ state
        outs[b] = float(np.sum(diag * np.abs(state) ** 2))
    return outs.astype(np.float32)


if __name__ == "__main__":
    # Deterministic parameter init (mirrors np.random.uniform(-2pi, 2pi, (4,3))).
    rng = np.random.default_rng(0)
    weights_np = rng.uniform(-2 * np.pi, 2 * np.pi, (N_QUBITS, 3))

    key = jax.random.PRNGKey(0)
    k1, k2 = jax.random.split(key)

    # Test 1: small batch (single grid step, zero-padded lanes).
    x_small = jax.random.uniform(k1, (8, TOTAL_FEATURES),
                                 minval=-np.pi, maxval=np.pi, dtype=jnp.float32)
    out_small = jax.block_until_ready(quantum_forward(x_small, weights_np))
    ref_small = _ref_forward(np.asarray(x_small, dtype=np.float64), weights_np)
    np.testing.assert_allclose(np.asarray(out_small), ref_small, rtol=1e-4, atol=1e-4)

    # Test 2: batch spanning multiple grid steps (validates tiled output plumbing).
    x_multi = jax.random.uniform(k2, (520, TOTAL_FEATURES),
                                 minval=-np.pi, maxval=np.pi, dtype=jnp.float32)
    out_multi = jax.block_until_ready(quantum_forward(x_multi, weights_np))
    ref_multi = _ref_forward(np.asarray(x_multi, dtype=np.float64), weights_np)
    np.testing.assert_allclose(np.asarray(out_multi), ref_multi, rtol=1e-4, atol=1e-4)

    print("KERNEL_OK")
</pallas_src>

<mosaic_0001>
module attributes {stable_mosaic.version = 11 : i64} {
  func.func @_qcircuit_kernel(%arg0: i32, %arg1: memref<4x128xf32, #tpu.memory_space<vmem>>, %arg2: memref<24x32xf32, #tpu.memory_space<vmem>>, %arg3: memref<1x128xf32, #tpu.memory_space<vmem>>) attributes {dimension_semantics = [#tpu.dimension_semantics<parallel>], iteration_bounds = array<i64: 1>, scalar_prefetch = 0 : i64, scratch_operands = 0 : i64, tpu.core_type = #tpu.core_type<tc>, window_params = [{transform_indices = @transform_0, window_bounds = array<i64: 4, 128>}, {pipeline_mode = #tpu.pipeline_mode<synchronous>, transform_indices = @transform_1, window_bounds = array<i64: 24, 32>}, {transform_indices = @transform_2, window_bounds = array<i64: 1, 128>}]} {
    %c0 = arith.constant 0 : index
    %c0_0 = arith.constant 0 : index
    %0 = vector.load %arg1[%c0, %c0_0] : memref<4x128xf32, #tpu.memory_space<vmem>>, vector<4x128xf32>
    %cst = arith.constant 5.000000e-01 : f32
    %1 = vector.broadcast %cst : f32 to vector<4x128xf32>
    %2 = arith.mulf %0, %1 : vector<4x128xf32>
    %3 = math.cos %2 : vector<4x128xf32>
    %4 = math.sin %2 : vector<4x128xf32>
    %5 = arith.mulf %3, %3 : vector<4x128xf32>
    %6 = arith.mulf %4, %4 : vector<4x128xf32>
    %7 = arith.mulf %3, %4 : vector<4x128xf32>
    %8 = arith.mulf %3, %5 : vector<4x128xf32>
    %9 = arith.mulf %4, %6 : vector<4x128xf32>
    %10 = arith.addf %8, %9 : vector<4x128xf32>
    %11 = arith.mulf %3, %6 : vector<4x128xf32>
    %12 = arith.mulf %4, %5 : vector<4x128xf32>
    %13 = arith.subf %11, %12 : vector<4x128xf32>
    %14 = arith.addf %3, %4 : vector<4x128xf32>
    %15 = arith.mulf %7, %14 : vector<4x128xf32>
    %16 = arith.subf %4, %3 : vector<4x128xf32>
    %17 = arith.mulf %7, %16 : vector<4x128xf32>
    %18 = arith.mulf %3, %10 : vector<4x128xf32>
    %19 = arith.mulf %4, %17 : vector<4x128xf32>
    %20 = arith.addf %18, %19 : vector<4x128xf32>
    %21 = arith.mulf %3, %13 : vector<4x128xf32>
    %22 = arith.mulf %4, %15 : vector<4x128xf32>
    %23 = arith.subf %21, %22 : vector<4x128xf32>
    %24 = arith.mulf %3, %15 : vector<4x128xf32>
    %25 = arith.mulf %4, %13 : vector<4x128xf32>
    %26 = arith.addf %24, %25 : vector<4x128xf32>
    %27 = arith.mulf %3, %17 : vector<4x128xf32>
    %28 = arith.mulf %4, %10 : vector<4x128xf32>
    %29 = arith.subf %27, %28 : vector<4x128xf32>
    %30 = vector.extract_strided_slice %20 {offsets = [0, 0], sizes = [1, 128], strides = [1, 1]} : vector<4x128xf32> to vector<1x128xf32>
    %31 = vector.extract_strided_slice %20 {offsets = [0, 0], sizes = [1, 128], strides = [1, 1]} : vector<4x128xf32> to vector<1x128xf32>
    %32 = vector.extract_strided_slice %26 {offsets = [0, 0], sizes = [1, 128], strides = [1, 1]} : vector<4x128xf32> to vector<1x128xf32>
    %33 = vector.extract_strided_slice %26 {offsets = [0, 0], sizes = [1, 128], strides = [1, 1]} : vector<4x128xf32> to vector<1x128xf32>
    %34 = tpu.concatenate %30, %31, %32, %33 in 0 : vector<1x128xf32>, vector<1x128xf32>, vector<1x128xf32>, vector<1x128xf32> -> vector<4x128xf32>
    %35 = vector.extract_strided_slice %23 {offsets = [0, 0], sizes = [1, 128], strides = [1, 1]} : vector<4x128xf32> to vector<1x128xf32>
    %36 = vector.extract_strided_slice %23 {offsets = [0, 0], sizes = [1, 128], strides = [1, 1]} : vector<4x128xf32> to vector<1x128xf32>
    %37 = vector.extract_strided_slice %29 {offsets = [0, 0], sizes = [1, 128], strides = [1, 1]} : vector<4x128xf32> to vector<1x128xf32>
    %38 = vector.extract_strided_slice %29 {offsets = [0, 0], sizes = [1, 128], strides = [1, 1]} : vector<4x128xf32> to vector<1x128xf32>
    %39 = tpu.concatenate %35, %36, %37, %38 in 0 : vector<1x128xf32>, vector<1x128xf32>, vector<1x128xf32>, vector<1x128xf32> -> vector<4x128xf32>
    %40 = vector.extract_strided_slice %20 {offsets = [1, 0], sizes = [1, 128], strides = [1, 1]} : vector<4x128xf32> to vector<1x128xf32>
    %41 = vector.extract_strided_slice %26 {offsets = [1, 0], sizes = [1, 128], strides = [1, 1]} : vector<4x128xf32> to vector<1x128xf32>
    %42 = vector.extract_strided_slice %20 {offsets = [1, 0], sizes = [1, 128], strides = [1, 1]} : vector<4x128xf32> to vector<1x128xf32>
    %43 = vector.extract_strided_slice %26 {offsets = [1, 0], sizes = [1, 128], strides = [1, 1]} : vector<4x128xf32> to vector<1x128xf32>
    %44 = tpu.concatenate %40, %41, %42, %43 in 0 : vector<1x128xf32>, vector<1x128xf32>, vector<1x128xf32>, vector<1x128xf32> -> vector<4x128xf32>
    %45 = vector.extract_strided_slice %23 {offsets = [1, 0], sizes = [1, 128], strides = [1, 1]} : vector<4x128xf32> to vector<1x128xf32>
    %46 = vector.extract_strided_slice %29 {offsets = [1, 0], sizes = [1, 128], strides = [1, 1]} : vector<4x128xf32> to vector<1x128xf32>
    %47 = vector.extract_strided_slice %23 {offsets = [1, 0], sizes = [1, 128], strides = [1, 1]} : vector<4x128xf32> to vector<1x128xf32>
    %48 = vector.extract_strided_slice %29 {offsets = [1, 0], sizes = [1, 128], strides = [1, 1]} : vector<4x128xf32> to vector<1x128xf32>
    %49 = tpu.concatenate %45, %46, %47, %48 in 0 : vector<1x128xf32>, vector<1x128xf32>, vector<1x128xf32>, vector<1x128xf32> -> vector<4x128xf32>
    %50 = arith.mulf %34, %44 : vector<4x128xf32>
    %51 = arith.mulf %39, %49 : vector<4x128xf32>
    %52 = arith.subf %50, %51 : vector<4x128xf32>
    %53 = arith.mulf %34, %49 : vector<4x128xf32>
    %54 = arith.mulf %39, %44 : vector<4x128xf32>
    %55 = arith.addf %53, %54 : vector<4x128xf32>
    %56 = vector.extract_strided_slice %20 {offsets = [2, 0], sizes = [1, 128], strides = [1, 1]} : vector<4x128xf32> to vector<1x128xf32>
    %57 = vector.extract_strided_slice %20 {offsets = [2, 0], sizes = [1, 128], strides = [1, 1]} : vector<4x128xf32> to vector<1x128xf32>
    %58 = vector.extract_strided_slice %26 {offsets = [2, 0], sizes = [1, 128], strides = [1, 1]} : vector<4x128xf32> to vector<1x128xf32>
    %59 = vector.extract_strided_slice %26 {offsets = [2, 0], sizes = [1, 128], strides = [1, 1]} : vector<4x128xf32> to vector<1x128xf32>
    %60 = tpu.concatenate %56, %57, %58, %59 in 0 : vector<1x128xf32>, vector<1x128xf32>, vector<1x128xf32>, vector<1x128xf32> -> vector<4x128xf32>
    %61 = vector.extract_strided_slice %23 {offsets = [2, 0], sizes = [1, 128], strides = [1, 1]} : vector<4x128xf32> to vector<1x128xf32>
    %62 = vector.extract_strided_slice %23 {offsets = [2, 0], sizes = [1, 128], strides = [1, 1]} : vector<4x128xf32> to vector<1x128xf32>
    %63 = vector.extract_strided_slice %29 {offsets = [2, 0], sizes = [1, 128], strides = [1, 1]} : vector<4x128xf32> to vector<1x128xf32>
    %64 = vector.extract_strided_slice %29 {offsets = [2, 0], sizes = [1, 128], strides = [1, 1]} : vector<4x128xf32> to vector<1x128xf32>
    %65 = tpu.concatenate %61, %62, %63, %64 in 0 : vector<1x128xf32>, vector<1x128xf32>, vector<1x128xf32>, vector<1x128xf32> -> vector<4x128xf32>
    %66 = vector.extract_strided_slice %20 {offsets = [3, 0], sizes = [1, 128], strides = [1, 1]} : vector<4x128xf32> to vector<1x128xf32>
    %67 = vector.extract_strided_slice %26 {offsets = [3, 0], sizes = [1, 128], strides = [1, 1]} : vector<4x128xf32> to vector<1x128xf32>
    %68 = vector.extract_strided_slice %20 {offsets = [3, 0], sizes = [1, 128], strides = [1, 1]} : vector<4x128xf32> to vector<1x128xf32>
    %69 = vector.extract_strided_slice %26 {offsets = [3, 0], sizes = [1, 128], strides = [1, 1]} : vector<4x128xf32> to vector<1x128xf32>
    %70 = tpu.concatenate %66, %67, %68, %69 in 0 : vector<1x128xf32>, vector<1x128xf32>, vector<1x128xf32>, vector<1x128xf32> -> vector<4x128xf32>
    %71 = vector.extract_strided_slice %23 {offsets = [3, 0], sizes = [1, 128], strides = [1, 1]} : vector<4x128xf32> to vector<1x128xf32>
    %72 = vector.extract_strided_slice %29 {offsets = [3, 0], sizes = [1, 128], strides = [1, 1]} : vector<4x128xf32> to vector<1x128xf32>
    %73 = vector.extract_strided_slice %23 {offsets = [3, 0], sizes = [1, 128], strides = [1, 1]} : vector<4x128xf32> to vector<1x128xf32>
    %74 = vector.extract_strided_slice %29 {offsets = [3, 0], sizes = [1, 128], strides = [1, 1]} : vector<4x128xf32> to vector<1x128xf32>
    %75 = tpu.concatenate %71, %72, %73, %74 in 0 : vector<1x128xf32>, vector<1x128xf32>, vector<1x128xf32>, vector<1x128xf32> -> vector<4x128xf32>
    %76 = arith.mulf %60, %70 : vector<4x128xf32>
    %77 = arith.mulf %65, %75 : vector<4x128xf32>
    %78 = arith.subf %76, %77 : vector<4x128xf32>
    %79 = arith.mulf %60, %75 : vector<4x128xf32>
    %80 = arith.mulf %65, %70 : vector<4x128xf32>
    %81 = arith.addf %79, %80 : vector<4x128xf32>
    %82 = vector.extract_strided_slice %52 {offsets = [0, 0], sizes = [1, 128], strides = [1, 1]} : vector<4x128xf32> to vector<1x128xf32>
    %83 = vector.extract_strided_slice %55 {offsets = [0, 0], sizes = [1, 128], strides = [1, 1]} : vector<4x128xf32> to vector<1x128xf32>
    %84 = vector.broadcast %82 : vector<1x128xf32> to vector<4x128xf32>
    %85 = arith.mulf %84, %78 : vector<4x128xf32>
    %86 = vector.broadcast %83 : vector<1x128xf32> to vector<4x128xf32>
    %87 = arith.mulf %86, %81 : vector<4x128xf32>
    %88 = arith.subf %85, %87 : vector<4x128xf32>
    %89 = vector.broadcast %82 : vector<1x128xf32> to vector<4x128xf32>
    %90 = arith.mulf %89, %81 : vector<4x128xf32>
    %91 = vector.broadcast %83 : vector<1x128xf32> to vector<4x128xf32>
    %92 = arith.mulf %91, %78 : vector<4x128xf32>
    %93 = arith.addf %90, %92 : vector<4x128xf32>
    %94 = vector.extract_strided_slice %52 {offsets = [1, 0], sizes = [1, 128], strides = [1, 1]} : vector<4x128xf32> to vector<1x128xf32>
    %95 = vector.extract_strided_slice %55 {offsets = [1, 0], sizes = [1, 128], strides = [1, 1]} : vector<4x128xf32> to vector<1x128xf32>
    %96 = vector.broadcast %94 : vector<1x128xf32> to vector<4x128xf32>
    %97 = arith.mulf %96, %78 : vector<4x128xf32>
    %98 = vector.broadcast %95 : vector<1x128xf32> to vector<4x128xf32>
    %99 = arith.mulf %98, %81 : vector<4x128xf32>
    %100 = arith.subf %97, %99 : vector<4x128xf32>
    %101 = vector.broadcast %94 : vector<1x128xf32> to vector<4x128xf32>
    %102 = arith.mulf %101, %81 : vector<4x128xf32>
    %103 = vector.broadcast %95 : vector<1x128xf32> to vector<4x128xf32>
    %104 = arith.mulf %103, %78 : vector<4x128xf32>
    %105 = arith.addf %102, %104 : vector<4x128xf32>
    %106 = vector.extract_strided_slice %52 {offsets = [2, 0], sizes = [1, 128], strides = [1, 1]} : vector<4x128xf32> to vector<1x128xf32>
    %107 = vector.extract_strided_slice %55 {offsets = [2, 0], sizes = [1, 128], strides = [1, 1]} : vector<4x128xf32> to vector<1x128xf32>
    %108 = vector.broadcast %106 : vector<1x128xf32> to vector<4x128xf32>
    %109 = arith.mulf %108, %78 : vector<4x128xf32>
    %110 = vector.broadcast %107 : vector<1x128xf32> to vector<4x128xf32>
    %111 = arith.mulf %110, %81 : vector<4x128xf32>
    %112 = arith.subf %109, %111 : vector<4x128xf32>
    %113 = vector.broadcast %106 : vector<1x128xf32> to vector<4x128xf32>
    %114 = arith.mulf %113, %81 : vector<4x128xf32>
    %115 = vector.broadcast %107 : vector<1x128xf32> to vector<4x128xf32>
    %116 = arith.mulf %115, %78 : vector<4x128xf32>
    %117 = arith.addf %114, %116 : vector<4x128xf32>
    %118 = vector.extract_strided_slice %52 {offsets = [3, 0], sizes = [1, 128], strides = [1, 1]} : vector<4x128xf32> to vector<1x128xf32>
    %119 = vector.extract_strided_slice %55 {offsets = [3, 0], sizes = [1, 128], strides = [1, 1]} : vector<4x128xf32> to vector<1x128xf32>
    %120 = vector.broadcast %118 : vector<1x128xf32> to vector<4x128xf32>
    %121 = arith.mulf %120, %78 : vector<4x128xf32>
    %122 = vector.broadcast %119 : vector<1x128xf32> to vector<4x128xf32>
    %123 = arith.mulf %122, %81 : vector<4x128xf32>
    %124 = arith.subf %121, %123 : vector<4x128xf32>
    %125 = vector.broadcast %118 : vector<1x128xf32> to vector<4x128xf32>
    %126 = arith.mulf %125, %81 : vector<4x128xf32>
    %127 = vector.broadcast %119 : vector<1x128xf32> to vector<4x128xf32>
    %128 = arith.mulf %127, %78 : vector<4x128xf32>
    %129 = arith.addf %126, %128 : vector<4x128xf32>
    %130 = tpu.concatenate %88, %100, %112, %124, %93, %105, %117, %129 in 0 : vector<4x128xf32>, vector<4x128xf32>, vector<4x128xf32>, vector<4x128xf32>, vector<4x128xf32>, vector<4x128xf32>, vector<4x128xf32>, vector<4x128xf32> -> vector<32x128xf32>
    %c0_1 = arith.constant 0 : index
    %c0_2 = arith.constant 0 : index
    %131 = vector.load %arg2[%c0_1, %c0_2] : memref<24x32xf32, #tpu.memory_space<vmem>>, vector<24x32xf32>
    %cst_3 = arith.constant dense<0.000000e+00> : vector<24x128xf32>
    %132 = tpu.matmul %131, %130, %cst_3 {dimension_numbers = #tpu.dot_dimension_numbers<[1], [0], [0], [1], [0, 0, 1, 1], [], []>} : vector<24x32xf32>, vector<32x128xf32>, vector<24x128xf32> -> vector<24x128xf32>
    %133 = tpu.iota {dimensions = array<i32: 0>} : vector<24x1xi32>
    %c5_i32 = arith.constant 5 : i32
    %134 = vector.broadcast %c5_i32 : i32 to vector<24x1xi32>
    %135 = arith.cmpi slt, %133, %134 : vector<24x1xi32>
    %c12_i32 = arith.constant 12 : i32
    %136 = vector.broadcast %c12_i32 : i32 to vector<24x1xi32>
    %137 = arith.cmpi sge, %133, %136 : vector<24x1xi32>
    %c17_i32 = arith.constant 17 : i32
    %138 = vector.broadcast %c17_i32 : i32 to vector<24x1xi32>
    %139 = arith.cmpi slt, %133, %138 : vector<24x1xi32>
    %140 = arith.andi %137, %139 : vector<24x1xi1>
    %141 = arith.ori %135, %140 : vector<24x1xi1>
    %cst_4 = arith.constant 1.000000e+00 : f32
    %cst_5 = arith.constant -1.000000e+00 : f32
    %142 = vector.broadcast %cst_4 : f32 to vector<24x1xf32>
    %143 = vector.broadcast %cst_5 : f32 to vector<24x1xf32>
    %144 = arith.select %141, %142, %143 : vector<24x1xi1>, vector<24x1xf32>
    %145 = arith.mulf %132, %132 : vector<24x128xf32>
    %146 = vector.broadcast %144 : vector<24x1xf32> to vector<24x128xf32>
    %147 = arith.mulf %145, %146 : vector<24x128xf32>
    %cst_6 = arith.constant dense<0.000000e+00> : vector<128xf32>
    %148 = vector.multi_reduction <add>, %147, %cst_6 [0] : vector<24x128xf32> to vector<128xf32>
    %149 = vector.shape_cast %148 : vector<128xf32> to vector<1x128xf32>
    %c0_7 = arith.constant 0 : index
    %c0_8 = arith.constant 0 : index
    %150 = vector.load %arg3[%c0_7, %c0_8] : memref<1x128xf32, #tpu.memory_space<vmem>>, vector<1x128xf32>
    tpu.vector_store %arg3[%c0_7, %c0_8], %149 {strides = array<i32>} : memref<1x128xf32, #tpu.memory_space<vmem>>, vector<1x128xf32>,
    return
  }
  func.func @transform_0(%arg0: i32) -> (i32, i32) {
    %c0_i32 = arith.constant 0 : i32
    %c0_i32_0 = arith.constant 0 : i32
    return %c0_i32, %arg0 : i32, i32
  }
  func.func @transform_1(%arg0: i32) -> (i32, i32) {
    %c0_i32 = arith.constant 0 : i32
    %c0_i32_0 = arith.constant 0 : i32
    %c0_i32_1 = arith.constant 0 : i32
    return %c0_i32, %c0_i32_0 : i32, i32
  }
  func.func @transform_2(%arg0: i32) -> (i32, i32) {
    %c0_i32 = arith.constant 0 : i32
    %c0_i32_0 = arith.constant 0 : i32
    return %c0_i32, %arg0 : i32, i32
  }
}

</mosaic_0001>

<llo_original>
// kernel: tpu_custom_call.1
$region0: #{tpu_custom_call.1}
  #allocation0 [shape = 'u32[]', space=smem, size = 0x4, offset = 0x4, fixed_abs, tag = 'smem constant byte address 0x4 - core index']
  #allocation1 [shape = 'u32[144,128]{1,0:T(1,128)}', space=vmem, size = 0x12000, scoped, tag = 'internal scratch']
  %s0 = inlined_call_operand.hbm [shape: f32[4,128], index: 0, kind: input, shape index: {}]
  %s1 = inlined_call_operand.hbm [shape: f32[24,32], index: 1, kind: input, shape index: {}]
  %s2 = inlined_call_operand.hbm [shape: f32[1,128], index: 2, kind: output, shape index: {}]
  %s3 = sld [smem:[#allocation0]]
  $region26: #{tpu_custom_call.1} parent=0
    _
  %s5 = ssub.s32 1, %s3
  %s6 = scalar_select 0, %s5, %s3
  $region1: #{tpu_custom_call.1} parent=0
    #allocation2 [shape = 'u8[2048]{0}', space=vmem, size = 0x800, scoped, tag = 'input window, operand 0, single buffered']
    #allocation3 [shape = 's32[1]{0}', space=sflag, size = 0x4, scoped, tag = 'scoped memory for tpu_custom_call.1']
    #allocation4 [shape = 's32[1]{0}', space=sflag, size = 0x4, scoped, tag = 'scoped memory for tpu_custom_call.1']
    #allocation5 [shape = 'u8[12288]{0}', space=vmem, size = 0x3000, scoped, tag = 'input window, operand 1, single buffered']
    #allocation6 [shape = 's32[1]{0}', space=sflag, size = 0x4, scoped, tag = 'scoped memory for tpu_custom_call.1']
    #allocation7 [shape = 'u8[512]{0}', space=vmem, size = 0x400, scoped, tag = 'output window, operand 0, single buffered']
    %7 = vsyncpa [#allocation3], 0
    %8 = vsyncpa [#allocation6], 0
    %9 = vsyncpa [#allocation4], 0
    // Predicated region
    $region2: #{tpu_custom_call.1} parent=1 // pred_check
      _
    $region3: #{tpu_custom_call.1} parent=1 // pred_check_branch
      %11 = sbr.rel (0) target = $region5
    $region4: #{tpu_custom_call.1} parent=1 // pred_region
      %s13 = ssub.s32 64, 64
      %14 = vsyncadd [#allocation3], %s13
      %s16 = sshll.u32 [#allocation2], 4
      %s17 = int_to_ptr.vmem [resolvable:$true] %s16
      %19 = dma.hbm_to_vmem [thread:$0]  %s0, 64, %s17, [#allocation3]
    $region5: #{tpu_custom_call.1} parent=1 // pred_fallthru
      _
    // Predicated region
    $region6: #{tpu_custom_call.1} parent=1 // pred_check
      _
    $region7: #{tpu_custom_call.1} parent=1 // pred_check_branch
      %21 = sbr.rel (0) target = $region9
    $region8: #{tpu_custom_call.1} parent=1 // pred_region
      %s23 = ssub.s32 384, 384
      %24 = vsyncadd [#allocation6], %s23
      %s25 = sshll.u32 [#allocation5], 4
      %s26 = int_to_ptr.vmem [resolvable:$true] %s25
      %31 = dma.hbm_to_vmem [thread:$0]  %s1, 384, %s26, [#allocation6], 128, 128, 8
    $region9: #{tpu_custom_call.1} parent=1 // pred_fallthru
      _
    // Predicated region
    $region10: #{tpu_custom_call.1} parent=1 // pred_check
      _
    $region11: #{tpu_custom_call.1} parent=1 // pred_check_branch
      %33 = sbr.rel (0) target = $region13
    $region12: #{tpu_custom_call.1} parent=1 // pred_region
      %34 = dma.done [#allocation3], 64
    $region13: #{tpu_custom_call.1} parent=1 // pred_fallthru
      _
    // Predicated region
    $region14: #{tpu_custom_call.1} parent=1 // pred_check
      _
    $region15: #{tpu_custom_call.1} parent=1 // pred_check_branch
      %36 = sbr.rel (0) target = $region17
    $region16: #{tpu_custom_call.1} parent=1 // pred_region
      %37 = dma.done [#allocation6], 384
    $region17: #{tpu_custom_call.1} parent=1 // pred_fallthru
      _
    %v38 = vld [vmem:[#allocation2] sm:$0xf]
    %v39 = vmul.f32 %v38, 0.5
    %v40 = vand.u32 2147483647, %v39
    %vm41 = vcmp.le.f32.partialorder %v40, 0.7853982
    %vm42 = vcmp.lt.s32.totalorder %v39, 0
    %v43 = vand.u32 %v39, 2139095040
    %v44 = vshrl.u32 %v43, 23
    %v45 = vsub.s32 %v44, 127
    %v46 = vand.u32 2147483647, %v39
    %v47 = vand.u32 %v46, 8388607
    %v48 = vor.u32 %v47, 8388608
    %v49 = vsub.s32 0, %v48
    %v50 = vadd.s32 %v45, 1
    %vm51 = vcmp.gt.s32.totalorder %v50, 0
    %v52 = vsel %vm51, %v50, 0
    %v53 = vshrl.u32 %v52, 5
    %v54 = vand.u32 %v52, 31
    %v55 = vsub.s32 32, %v54
    %v56 = vshrl.u32 683565275, %v55
    %v57 = vshll.u32 683565275, %v54
    %v58 = vshrl.u32 2475754826, %v55
    %v59 = vor.u32 %v57, %v58
    %v60 = vshll.u32 2475754826, %v54
    %v61 = vshrl.u32 2131351028, %v55
    %v62 = vor.u32 %v60, %v61
    %v63 = vshll.u32 2131351028, %v54
    %v64 = vshrl.u32 2102212464, %v55
    %v65 = vor.u32 %v63, %v64
    %v66 = vshll.u32 2102212464, %v54
    %v67 = vshrl.u32 920167782, %v55
    %v68 = vor.u32 %v66, %v67
    %v69 = vshll.u32 920167782, %v54
    %v70 = vshrl.u32 1326507024, %v55
    %v71 = vor.u32 %v69, %v70
    %vm72 = vcmp.lt.s32.totalorder %v53, 1
    %vm73 = vcmp.lt.s32.totalorder %v53, 2
    %vm74 = vcmp.lt.s32.totalorder %v53, 3
    %vm75 = vcmp.lt.s32.totalorder %v53, 4
    %v76 = vsel %vm72, %v56, %v59
    %v77 = vsel %vm75, %v65, 2102212464
    %v78 = vsel %vm74, %v62, %v77
    %v79 = vsel %vm73, %v76, %v78
    %v80 = vsel %vm72, %v59, %v62
    %v81 = vsel %vm75, %v68, 920167782
    %v82 = vsel %vm74, %v65, %v81
    %v83 = vsel %vm73, %v80, %v82
    %v84 = vsel %vm72, %v62, %v65
    %v85 = vsel %vm75, %v71, 1326507024
    %v86 = vsel %vm74, %v68, %v85
    %v87 = vsel %vm73, %v84, %v86
    %v88 = vshll.u32 %v48, 8
    %v89 = vmul.u32.u64.compose %v88, %v87
    %v90 = vextract.low.u32 %v89
    %v91 = vextract.high.u32 %v89
    %v92 = vmul.u32.u64.compose %v88, %v83
    %v93 = vextract.low.u32 %v92
    %v94 = vextract.high.u32 %v92
    %v95 = vmul.u32 %v88, %v79
    %v96 = vadd.s32 %v91, %v93
    %vm97 = vc.u32 %v91, %v93
    %v98 = vadd.s32 %v94, 1
    %v99 = vsel %vm97, %v98, %v94
    %v100 = vadd.s32 %v95, %v99
    %v101 = vadd.s32 %v100, 536870912
    %v102 = vshrl.u32 %v101, 30
    %v103 = vshll.u32 %v102, 30
    %v104 = vsub.s32 %v100, %v103
    %vm105 = vcmp.lt.s32.totalorder %v104, 0
    %v106 = vsub.s32 0, %v104
    %v107 = vsel %vm105, %v106, %v104
    %v108 = vclz %v107
    %v109 = vsub.s32 %v108, 2
    %vm110 = vcmp.gt.s32.totalorder 0, %v109
    %v111 = vsel %vm110, 0, %v109
    %v112 = vsub.s32 32, %v111
    %v113 = vshll.u32 %v104, %v111
    %v114 = vshrl.u32 %v96, %v112
    %v115 = vor.u32 %v113, %v114
    %v116 = vsub.s32 4294967266, %v111
    %v117 = vadd.s32 %v116, 127
    %v118 = vshll.u32 %v117, 23
    %v119 = vor.u32 4788187, %v118
    %v120 = vand.u32 2147483647, %v119
    %v122 = vcvt.s32.f32 %v115
    %v123 = vmul.f32 %v122, %v120
    %v124 = vxor.u32 %v123, 2147483648
    %v125 = vsel %vm42, %v124, %v123
    %v126 = vsub.s32 4, %v102
    %v127 = vsel %vm42, %v126, %v102
    %v128 = vsel %vm41, %v39, %v125
    %v129 = vsel %vm41, 0, %v127
    %v130 = vcosq.f32.pop %v128
    %v131 = vsinq.f32.pop %v128
    %vm132 = vweird.f32 %v39
    %v133 = vand.u32 %v129, 3
    %vm134 = vcmp.lt.s32.totalorder %v133, 2
    %vm135 = vcmp.eq.s32.totalorder %v133, 0
    %v136 = vxor.u32 %v131, 2147483648
    %v137 = vsel %vm135, %v130, %v136
    %vm138 = vcmp.eq.s32.totalorder %v133, 2
    %v139 = vxor.u32 %v130, 2147483648
    %v140 = vsel %vm138, %v139, %v131
    %v141 = vsel %vm134, %v137, %v140
    %v142 = vsel %vm132, nan, %v141
    %v143 = vand.u32 2147483647, %v39
    %vm144 = vcmp.le.f32.partialorder %v143, 0.7853982
    %vm145 = vcmp.lt.s32.totalorder %v39, 0
    %v146 = vand.u32 %v39, 2139095040
    %v147 = vshrl.u32 %v146, 23
    %v148 = vsub.s32 %v147, 127
    %v149 = vand.u32 2147483647, %v39
    %v150 = vand.u32 %v149, 8388607
    %v151 = vor.u32 %v150, 8388608
    %v152 = vsub.s32 0, %v151
    %v153 = vadd.s32 %v148, 1
    %vm154 = vcmp.gt.s32.totalorder %v153, 0
    %v155 = vsel %vm154, %v153, 0
    %v156 = vshrl.u32 %v155, 5
    %v157 = vand.u32 %v155, 31
    %v158 = vsub.s32 32, %v157
    %v159 = vshrl.u32 683565275, %v158
    %v160 = vshll.u32 683565275, %v157
    %v161 = vshrl.u32 2475754826, %v158
    %v162 = vor.u32 %v160, %v161
    %v163 = vshll.u32 2475754826, %v157
    %v164 = vshrl.u32 2131351028, %v158
    %v165 = vor.u32 %v163, %v164
    %v166 = vshll.u32 2131351028, %v157
    %v167 = vshrl.u32 2102212464, %v158
    %v168 = vor.u32 %v166, %v167
    %v169 = vshll.u32 2102212464, %v157
    %v170 = vshrl.u32 920167782, %v158
    %v171 = vor.u32 %v169, %v170
    %v172 = vshll.u32 920167782, %v157
    %v173 = vshrl.u32 1326507024, %v158
    %v174 = vor.u32 %v172, %v173
    %vm175 = vcmp.lt.s32.totalorder %v156, 1
    %vm176 = vcmp.lt.s32.totalorder %v156, 2
    %vm177 = vcmp.lt.s32.totalorder %v156, 3
    %vm178 = vcmp.lt.s32.totalorder %v156, 4
    %v179 = vsel %vm175, %v159, %v162
    %v180 = vsel %vm178, %v168, 2102212464
    %v181 = vsel %vm177, %v165, %v180
    %v182 = vsel %vm176, %v179, %v181
    %v183 = vsel %vm175, %v162, %v165
    %v184 = vsel %vm178, %v171, 920167782
    %v185 = vsel %vm177, %v168, %v184
    %v186 = vsel %vm176, %v183, %v185
    %v187 = vsel %vm175, %v165, %v168
    %v188 = vsel %vm178, %v174, 1326507024
    %v189 = vsel %vm177, %v171, %v188
    %v190 = vsel %vm176, %v187, %v189
    %v191 = vshll.u32 %v151, 8
    %v192 = vmul.u32.u64.compose %v191, %v190
    %v193 = vextract.low.u32 %v192
    %v194 = vextract.high.u32 %v192
    %v195 = vmul.u32.u64.compose %v191, %v186
    %v196 = vextract.low.u32 %v195
    %v197 = vextract.high.u32 %v195
    %v198 = vmul.u32 %v191, %v182
    %v199 = vadd.s32 %v194, %v196
    %vm200 = vc.u32 %v194, %v196
    %v201 = vadd.s32 %v197, 1
    %v202 = vsel %vm200, %v201, %v197
    %v203 = vadd.s32 %v198, %v202
    %v204 = vadd.s32 %v203, 536870912
    %v205 = vshrl.u32 %v204, 30
    %v206 = vshll.u32 %v205, 30
    %v207 = vsub.s32 %v203, %v206
    %vm208 = vcmp.lt.s32.totalorder %v207, 0
    %v209 = vsub.s32 0, %v207
    %v210 = vsel %vm208, %v209, %v207
    %v211 = vclz %v210
    %v212 = vsub.s32 %v211, 2
    %vm213 = vcmp.gt.s32.totalorder 0, %v212
    %v214 = vsel %vm213, 0, %v212
    %v215 = vsub.s32 32, %v214
    %v216 = vshll.u32 %v207, %v214
    %v217 = vshrl.u32 %v199, %v215
    %v218 = vor.u32 %v216, %v217
    %v219 = vsub.s32 4294967266, %v214
    %v220 = vadd.s32 %v219, 127
    %v221 = vshll.u32 %v220, 23
    %v222 = vor.u32 4788187, %v221
    %v223 = vand.u32 2147483647, %v222
    %v225 = vcvt.s32.f32 %v218
    %v226 = vmul.f32 %v225, %v223
    %v227 = vxor.u32 %v226, 2147483648
    %v228 = vsel %vm145, %v227, %v226
    %v229 = vsub.s32 4, %v205
    %v230 = vsel %vm145, %v229, %v205
    %v231 = vsel %vm144, %v39, %v228
    %v232 = vsel %vm144, 0, %v230
    %v233 = vcosq.f32.pop %v231
    %v234 = vsinq.f32.pop %v231
    %vm235 = vweird.f32 %v39
    %v236 = vadd.s32 %v232, 3
    %v237 = vand.u32 %v236, 3
    %vm238 = vcmp.lt.s32.totalorder %v237, 2
    %vm239 = vcmp.eq.s32.totalorder %v237, 0
    %v240 = vxor.u32 %v234, 2147483648
    %v241 = vsel %vm239, %v233, %v240
    %vm242 = vcmp.eq.s32.totalorder %v237, 2
    %v243 = vxor.u32 %v233, 2147483648
    %v244 = vsel %vm242, %v243, %v234
    %v245 = vsel %vm238, %v241, %v244
    %v246 = vsel %vm235, nan, %v245
    %v247 = vmul.f32 %v142, %v142
    %v248 = vmul.f32 %v246, %v246
    %v249 = vmul.f32 %v142, %v246
    %v250 = vmul.f32 %v142, %v247
    %v251 = vmul.f32 %v246, %v248
    %v252 = vadd.f32 %v250, %v251
    %v253 = vmul.f32 %v142, %v248
    %v254 = vmul.f32 %v246, %v247
    %v255 = vsub.f32 %v253, %v254
    %v256 = vadd.f32 %v142, %v246
    %v257 = vmul.f32 %v249, %v256
    %v258 = vsub.f32 %v246, %v142
    %v259 = vmul.f32 %v249, %v258
    %v260 = vmul.f32 %v142, %v252
    %v261 = vmul.f32 %v246, %v259
    %v262 = vadd.f32 %v260, %v261
    %v263 = vmul.f32 %v142, %v255
    %v264 = vmul.f32 %v246, %v257
    %v265 = vsub.f32 %v263, %v264
    %v266 = vmul.f32 %v142, %v257
    %v267 = vmul.f32 %v246, %v255
    %v268 = vadd.f32 %v266, %v267
    %v269 = vmul.f32 %v142, %v259
    %v270 = vmul.f32 %v246, %v252
    %v271 = vsub.f32 %v269, %v270
    %v273 = vrot.slane %v262, 7
    %v276 = vrot.slane %v268, 6
    %v278 = vrot.slane %v268, 5
    %vm280 = vcmask 1040384
    %v281 = vsel %vm280, %v262, %v273
    %vm282 = vcmask 1041408
    %v283 = vsel %vm282, %v281, %v276
    %vm284 = vcmask 1042432
    %v285 = vsel %vm284, %v283, %v278
    %v287 = vrot.slane %v265, 7
    %v290 = vrot.slane %v271, 6
    %v292 = vrot.slane %v271, 5
    %v294 = vsel %vm280, %v265, %v287
    %v295 = vsel %vm282, %v294, %v290
    %v296 = vsel %vm284, %v295, %v292
    %v297 = vrot.slane %v262, 1
    %v299 = vsel %vm280, %v297, %v268
    %v300 = vsel %vm282, %v299, %v273
    %v301 = vsel %vm284, %v300, %v276
    %v302 = vrot.slane %v265, 1
    %v304 = vsel %vm280, %v302, %v271
    %v305 = vsel %vm282, %v304, %v287
    %v306 = vsel %vm284, %v305, %v290
    %v307 = vmul.f32 %v285, %v301
    %v308 = vmul.f32 %v296, %v306
    %v309 = vsub.f32 %v307, %v308
    %v310 = vmul.f32 %v285, %v306
    %v311 = vmul.f32 %v296, %v301
    %v312 = vadd.f32 %v310, %v311
    %v313 = vrot.slane %v262, 2
    %v315 = vrot.slane %v268, 7
    %v317 = vsel %vm280, %v313, %v297
    %v318 = vsel %vm282, %v317, %v268
    %v319 = vsel %vm284, %v318, %v315
    %v320 = vrot.slane %v265, 2
    %v322 = vrot.slane %v271, 7
    %v324 = vsel %vm280, %v320, %v302
    %v325 = vsel %vm282, %v324, %v271
    %v326 = vsel %vm284, %v325, %v322
    %v327 = vrot.slane %v262, 3
    %v329 = vrot.slane %v268, 2
    %v331 = vsel %vm280, %v327, %v329
    %v332 = vsel %vm282, %v331, %v297
    %v333 = vsel %vm284, %v332, %v268
    %v334 = vrot.slane %v265, 3
    %v336 = vrot.slane %v271, 2
    %v338 = vsel %vm280, %v334, %v336
    %v339 = vsel %vm282, %v338, %v302
    %v340 = vsel %vm284, %v339, %v271
    %v341 = vmul.f32 %v319, %v333
    %v342 = vmul.f32 %v326, %v340
    %v343 = vsub.f32 %v341, %v342
    %v344 = vmul.f32 %v319, %v340
    %v345 = vmul.f32 %v326, %v333
    %v346 = vadd.f32 %v344, %v345
    %v347 = vlaneseq
    %v348 = vshrl.u32 %v347, 7
    %v349 = vsub.s32 0, %v348
    %v350 = vrot.slane %v309, %v349
    %v351 = vmul.f32 %v350, %v343
    %v352 = vlaneseq
    %v353 = vshrl.u32 %v352, 7
    %v354 = vsub.s32 0, %v353
    %v355 = vrot.slane %v312, %v354
    %v356 = vmul.f32 %v355, %v346
    %v357 = vsub.f32 %v351, %v356
    %v358 = vmul.f32 %v350, %v346
    %v359 = vmul.f32 %v355, %v343
    %v360 = vadd.f32 %v358, %v359
    %v361 = vlaneseq
    %v362 = vshrl.u32 %v361, 7
    %v363 = vsub.s32 1, %v362
    %v364 = vrot.slane %v309, %v363
    %v365 = vmul.f32 %v364, %v343
    %v366 = vlaneseq
    %v367 = vshrl.u32 %v366, 7
    %v368 = vsub.s32 1, %v367
    %v369 = vrot.slane %v312, %v368
    %v370 = vmul.f32 %v369, %v346
    %v371 = vsub.f32 %v365, %v370
    %v372 = vmul.f32 %v364, %v346
    %v373 = vmul.f32 %v369, %v343
    %v374 = vadd.f32 %v372, %v373
    %v375 = vlaneseq
    %v376 = vshrl.u32 %v375, 7
    %v377 = vsub.s32 2, %v376
    %v378 = vrot.slane %v309, %v377
    %v379 = vmul.f32 %v378, %v343
    %v380 = vlaneseq
    %v381 = vshrl.u32 %v380, 7
    %v382 = vsub.s32 2, %v381
    %v383 = vrot.slane %v312, %v382
    %v384 = vmul.f32 %v383, %v346
    %v385 = vsub.f32 %v379, %v384
    %v386 = vmul.f32 %v378, %v346
    %v387 = vmul.f32 %v383, %v343
    %v388 = vadd.f32 %v386, %v387
    %v389 = vlaneseq
    %v390 = vshrl.u32 %v389, 7
    %v391 = vsub.s32 3, %v390
    %v392 = vrot.slane %v309, %v391
    %v393 = vmul.f32 %v392, %v343
    %v394 = vlaneseq
    %v395 = vshrl.u32 %v394, 7
    %v396 = vsub.s32 3, %v395
    %v397 = vrot.slane %v312, %v396
    %v398 = vmul.f32 %v397, %v346
    %v399 = vsub.f32 %v393, %v398
    %v400 = vmul.f32 %v392, %v346
    %v401 = vmul.f32 %v397, %v343
    %v402 = vadd.f32 %v400, %v401
    %v404 = vrot.slane %v371, 4
    %v407 = vrot.slane %v399, 4
    %v410 = vrot.slane %v374, 4
    %v413 = vrot.slane %v402, 4
    %vm415 = vcmask 1043456
    %v416 = vsel %vm415, %v357, %v404
    %v417 = vsel %vm415, %v385, %v407
    %v418 = vsel %vm415, %v360, %v410
    %v419 = vsel %vm415, %v388, %v413
    %v420 = vld [vmem:[#allocation5] sm:$0xff]
    %v421 = vld [vmem:[#allocation5 + $0x8] sm:$0xff]
    %v422 = vld [vmem:[#allocation5 + $0x10] sm:$0xff]
    %vm423 = vcmask 261120
    %v425 = vsel %vm423, %v420, 0
    %v428 = vsel %vm423, %v421, 0
    %v431 = vsel %vm423, %v422, 0
    %433 = vmatprep.subr.mxu0 0.0
    %434 = vmatpush1.msra.mxu0 %v416
    %435 = vmatprep.subr.mxu0 0.0
    %436 = vmatpush1.msra.mxu0 %v417
    %437 = vmatprep.subr.mxu0 0.0
    %438 = vmatpush1.msra.mxu0 %v418
    %439 = vmatprep.subr.mxu0 0.0
    %440 = vmatpush1.msra.mxu0 %v419
    %441 = vmatprep.subr.mxu0 0.0
    %442 = vmatpush1.msra.mxu0 0.0
    %443 = vmatprep.subr.mxu0 0.0
    %444 = vmatpush1.msra.mxu0 0.0
    %445 = vmatprep.subr.mxu0 0.0
    %446 = vmatpush1.msra.mxu0 0.0
    %447 = vmatprep.subr.mxu0 0.0
    %448 = vmatpush1.msra.mxu0 0.0
    %449 = vmatprep.subr.mxu0 0.0
    %450 = vmatpush1.msra.mxu0 0.0
    %451 = vmatprep.subr.mxu0 0.0
    %452 = vmatpush1.msra.mxu0 0.0
    %453 = vmatprep.subr.mxu0 0.0
    %454 = vmatpush1.msra.mxu0 0.0
    %455 = vmatprep.subr.mxu0 0.0
    %456 = vmatpush1.msra.mxu0 0.0
    %457 = vmatprep.subr.mxu0 0.0
    %458 = vmatpush1.msra.mxu0 0.0
    %459 = vmatprep.subr.mxu0 0.0
    %460 = vmatpush1.msra.mxu0 0.0
    %461 = vmatprep.subr.mxu0 0.0
    %462 = vmatpush1.msra.mxu0 0.0
    %463 = vmatprep.subr.mxu0 0.0
    %464 = vmatpush1.msra.mxu0 0.0
    %465 = vmatprep.subr.mxu0 0.0
    %466 = vmatpush1.msra.mxu0 0.0
    %467 = vmatprep.subr.mxu0 0.0
    %468 = vmatpush1.msra.mxu0 0.0
    %469 = vmatprep.subr.mxu0 0.0
    %470 = vmatpush1.msra.mxu0 0.0
    %471 = vmatprep.subr.mxu0 0.0
    %472 = vmatpush1.msra.mxu0 0.0
    %473 = vmatprep.subr.mxu0 0.0
    %474 = vmatpush1.msra.mxu0 0.0
    %475 = vmatprep.subr.mxu0 0.0
    %476 = vmatpush1.msra.mxu0 0.0
    %477 = vmatprep.subr.mxu0 0.0
    %478 = vmatpush1.msra.mxu0 0.0
    %479 = vmatprep.subr.mxu0 0.0
    %480 = vmatpush1.msra.mxu0 0.0
    %481 = vmatprep.subr.mxu0 0.0
    %482 = vmatpush1.msra.mxu0 0.0
    %483 = vmatprep.subr.mxu0 0.0
    %484 = vmatpush1.msra.mxu0 0.0
    %485 = vmatprep.subr.mxu0 0.0
    %486 = vmatpush1.msra.mxu0 0.0
    %487 = vmatprep.subr.mxu0 0.0
    %488 = vmatpush1.msra.mxu0 0.0
    %489 = vmatprep.subr.mxu0 0.0
    %490 = vmatpush1.msra.mxu0 0.0
    %491 = vmatprep.subr.mxu0 0.0
    %492 = vmatpush1.msra.mxu0 0.0
    %493 = vmatprep.subr.mxu0 0.0
    %494 = vmatpush1.msra.mxu0 0.0
    %495 = vmatprep.subr.mxu0 0.0
    %496 = vmatpush1.msra.mxu0 0.0
    %497 = vmatprep.mubr.f32.mxu0 0.0
    %498 = vmatmul.mubr.f32.gmra.mrb[0].mxu0 %v425
    %v499 = vpop.f32.mrb[0].mxu0
    %v500 = vadd.f32 0.0, %v499
    %v501 = vpop.f32.mrb[0].mxu0
    %502 = vmatprep.mubr.f32.mxu0 0.0
    %503 = vmatmul.mubr.f32.gmra.mrb[0].mxu0 %v428
    %v504 = vpop.f32.mrb[0].mxu0
    %v505 = vadd.f32 0.0, %v504
    %v506 = vpop.f32.mrb[0].mxu0
    %507 = vmatprep.mubr.f32.mxu0 0.0
    %508 = vmatmul.mubr.f32.gmra.mrb[0].mxu0 %v431
    %v509 = vpop.f32.mrb[0].mxu0
    %v510 = vadd.f32 0.0, %v509
    %v511 = vpop.f32.mrb[0].mxu0
    %512 = vdwg.mxu0
    %v513 = vlaneseq
    %v514 = vshrl.u32 %v513, 7
    %v515 = vadd.s32 %v514, 8
    %v516 = vadd.s32 %v514, 16
    %vm517 = vcmp.lt.s32.totalorder %v514, 5
    %vm518 = vcmp.lt.s32.totalorder %v515, 5
    %vm519 = vcmp.lt.s32.totalorder %v516, 5
    %vm520 = vcmp.ge.s32.totalorder %v514, 12
    %vm521 = vcmp.ge.s32.totalorder %v515, 12
    %vm522 = vcmp.ge.s32.totalorder %v516, 12
    %vm523 = vcmp.lt.s32.totalorder %v514, 17
    %vm524 = vcmp.lt.s32.totalorder %v515, 17
    %vm525 = vcmp.lt.s32.totalorder %v516, 17
    %vm526 = vmand %vm520, %vm523
    %vm527 = vmand %vm521, %vm524
    %vm528 = vmand %vm522, %vm525
    %vm529 = vmor %vm517, %vm526
    %vm530 = vmor %vm518, %vm527
    %vm531 = vmor %vm519, %vm528
    %v532 = vsel %vm529, 1.0, -1.0
    %v533 = vsel %vm530, 1.0, -1.0
    %v534 = vsel %vm531, 1.0, -1.0
    %v535 = vmul.f32 %v500, %v500
    %v536 = vmul.f32 %v505, %v505
    %v537 = vmul.f32 %v510, %v510
    %v538 = vmul.f32 %v535, %v532
    %v539 = vmul.f32 %v536, %v533
    %v540 = vmul.f32 %v537, %v534
    %v541 = vadd.f32 %v538, %v539
    %v542 = vadd.f32 %v541, %v540
    %v543 = vrot.slane %v542, 4
    %v544 = vadd.f32 %v542, %v543
    %v545 = vrot.slane %v544, 2
    %v546 = vadd.f32 %v544, %v545
    %v547 = vrot.slane %v546, 1
    %v548 = vadd.f32 %v546, %v547
    %549 = vst [vmem:[#allocation7] sm:$0x1] %v548
    // Predicated region
    $region18: #{tpu_custom_call.1} parent=1 // pred_check
      _
    $region19: #{tpu_custom_call.1} parent=1 // pred_check_branch
      %551 = sbr.rel (0) target = $region21
    $region20: #{tpu_custom_call.1} parent=1 // pred_region
      %s553 = ssub.s32 16, 16
      %554 = vsyncadd [#allocation4], %s553
      %s556 = sshll.u32 [#allocation7], 4
      %s557 = int_to_ptr.vmem [resolvable:$true] %s556
      %559 = dma.vmem_to_hbm [thread:$0]  %s557, 16, %s2, [#allocation4]
    $region21: #{tpu_custom_call.1} parent=1 // pred_fallthru
      _
    // Predicated region
    $region22: #{tpu_custom_call.1} parent=1 // pred_check
      _
    $region23: #{tpu_custom_call.1} parent=1 // pred_check_branch
      %561 = sbr.rel (0) target = $region25
    $region24: #{tpu_custom_call.1} parent=1 // pred_region
      %562 = dma.done [#allocation4], 16
    $region25: #{tpu_custom_call.1} parent=1 // pred_fallthru
      _
    %563 = vsyncpa [#allocation3], 1
    %564 = vsyncpa [#allocation6], 1
    %565 = vsyncpa [#allocation4], 1

</llo_original>
